<compile_context>
chip_gen: v6e
topology: v6e:2x2x1
jax: 0.10.0
libtpu: 0.0.40
codegen_flags: <defaults>
</compile_context>

<pallas_src>
import functools

import jax
import jax.numpy as jnp
from jax import lax
from jax.experimental import pallas as pl
from jax.experimental.pallas import tpu as pltpu

# ---- small, module-consistent config (real RCAN uses C=64, R=16, 16 blocks) ----
NUM_RESIDUAL_BLOCKS = 2
NUM_CHANNELS = 32
REDUCTION_RATIO = 4
KERNEL_SIZE = 3


# ----------------------------- roll-direction probe -----------------------------

@functools.lru_cache(maxsize=1)
def _roll_shifts_to_higher_lane_indices():
  """One-time probe of pltpu.roll's direction convention.

  Returns True if pltpu.roll matches np.roll (positive shift moves data toward
  higher lane indices), so the main kernel can pick the correct shift sign for
  its circular im2col taps regardless of the installed jax's convention.
  """
  def k(x_ref, o_ref):
    o_ref[...] = pltpu.roll(x_ref[...], shift=1, axis=1)

  probe = pl.pallas_call(
      k, out_shape=jax.ShapeDtypeStruct((8, 128), jnp.float32),
  )(lax.broadcasted_iota(jnp.float32, (8, 128), 1))
  return bool(probe[0, 0] == 127.0)


# ----------------------------- fused Pallas kernel -----------------------------

def _residual_group_kernel(
    x_ref, w1_ref, b1_ref, w2_ref, b2_ref,
    wdt_ref, bd_ref, wu_ref, bu_ref, wf_ref, bf_ref,
    out_ref, patch_ref, *,
    num_images, hh, ww, num_blocks, roll_np_like):
  """Whole ResidualGroup; activations are (C, num_images*H*W), lane-dense."""
  f32 = jnp.float32
  bf16 = jnp.bfloat16
  c = x_ref.shape[0]
  hw = hh * ww
  lanes = num_images * hw

  # ---- per-lane coordinates & halo masks: built ONCE, reused by all 5 convs ----
  lane = lax.broadcasted_iota(jnp.int32, (c, lanes), 1)
  sp = lane % hw                           # position inside each image
  yy, xx = sp // ww, sp % ww
  m_top, m_bot = yy >= 1, yy <= hh - 2
  m_lft, m_rgt = xx >= 1, xx <= ww - 2
  tap_masks = []
  for dy in range(KERNEL_SIZE):
    for dx in range(KERNEL_SIZE):
      m = None
      if dy == 0:
        m = m_top
      elif dy == KERNEL_SIZE - 1:
        m = m_bot
      if dx == 0:
        m = m_lft if m is None else m & m_lft
      elif dx == KERNEL_SIZE - 1:
        m = m_rgt if m is None else m & m_rgt
      tap_masks.append(m)
  # Masks for merging per-image attention scales back into the (C, lanes) slab.
  img_masks = ([lane // hw == i for i in range(num_images)]
               if num_images > 1 else [None])

  def conv3x3(h, w2d, bias, relu):
    """'Same' 3x3 conv of a (C, lanes) f32 slab: 9 rolled+masked taps written
    into the persistent bf16 patch scratch, then ONE (C,9C)x(9C,lanes) bf16 MXU
    matmul with f32 accumulation."""
    for t in range(KERNEL_SIZE * KERNEL_SIZE):
      dy, dx = divmod(t, KERNEL_SIZE)
      s = (dy - 1) * ww + (dx - 1)          # source lane offset for this tap
      if s == 0:
        tap = h
      else:
        amt = (-s) % lanes if roll_np_like else s % lanes
        tap = pltpu.roll(h, shift=amt, axis=1)   # circular; wraps masked below
      if tap_masks[t] is not None:
        tap = jnp.where(tap_masks[t], tap, 0.0)
      patch_ref[t * c:(t + 1) * c, :] = tap.astype(bf16)
    acc = jnp.dot(w2d, patch_ref[...], preferred_element_type=f32) + bias
    return jnp.maximum(acc, 0.0) if relu else acc        # (C, lanes) f32

  x0 = x_ref[...].astype(f32)                            # (C, lanes)
  h = x0
  for blk in range(num_blocks):
    r = conv3x3(h, w1_ref[blk], b1_ref[blk], relu=True)
    r = conv3x3(r, w2_ref[blk], b2_ref[blk], relu=False)
    # Channel attention (squeeze/excite) per image, on the VPU/XLU (no tiny
    # M=1 / N=1 MXU matmuls).  Pooling uses static, tile-aligned lane slices.
    wd, bd = wdt_ref[blk], bd_ref[blk]
    wu, bu = wu_ref[blk], bu_ref[blk]
    scale = None
    for img in range(num_images):
      pooled = jnp.mean(r[:, img * hw:(img + 1) * hw], axis=1, keepdims=True)
      z = jnp.maximum(jnp.sum(wd * pooled, axis=0, keepdims=True) + bd, 0.0)
      att = jax.nn.sigmoid(jnp.sum(wu * z, axis=1, keepdims=True) + bu)  # (C,1)
      scale = att if img == 0 else jnp.where(img_masks[img], att, scale)
    h = h + r * scale                                    # block residual
  final = conv3x3(h, wf_ref[...], bf_ref[...], relu=False)
  out_ref[...] = (x0 + final).astype(out_ref.dtype)      # group residual


# ----------------------------- wrapper -----------------------------

def residual_group_forward(x, params):
  """x: (N, C, H, W) float32 (PyTorch NCHW). Returns the same shape."""
  n, c, h, w = x.shape
  hw = h * w
  lanes = n * hw
  nb = len(params["blocks"])
  cr = params["blocks"][0]["w_down"].shape[0]

  def conv_w(w_hwio):
    # HWIO (3,3,Cin,Cout) -> (Cout, 9*Cin), bf16 for the MXU (f32 accumulate).
    o = jnp.transpose(w_hwio, (3, 0, 1, 2)).reshape(w_hwio.shape[3], -1)
    return o.astype(jnp.bfloat16)

  w1 = jnp.stack([conv_w(p["w_conv1"]) for p in params["blocks"]])   # (nb,C,9C)
  b1 = jnp.stack([p["b_conv1"].reshape(c, 1) for p in params["blocks"]])
  w2 = jnp.stack([conv_w(p["w_conv2"]) for p in params["blocks"]])
  b2 = jnp.stack([p["b_conv2"].reshape(c, 1) for p in params["blocks"]])
  wdt = jnp.stack([p["w_down"].T for p in params["blocks"]])         # (nb,C,Cr)
  bd = jnp.stack([p["b_down"].reshape(1, cr) for p in params["blocks"]])
  wu = jnp.stack([p["w_up"] for p in params["blocks"]])              # (nb,C,Cr)
  bu = jnp.stack([p["b_up"].reshape(c, 1) for p in params["blocks"]])
  wf = conv_w(params["w_final"])                                     # (C, 9C)
  bf = params["b_final"].reshape(c, 1)

  # Channel-major with the batch folded into the lane axis: (C, N*H*W).
  x_merged = jnp.transpose(x.reshape(n, c, hw), (1, 0, 2)).reshape(c, lanes)

  def full_spec(arr):
    nd = arr.ndim
    return pl.BlockSpec(arr.shape, lambda i, _nd=nd: (0,) * _nd)

  kern = functools.partial(
      _residual_group_kernel, num_images=n, hh=h, ww=w, num_blocks=nb,
      roll_np_like=_roll_shifts_to_higher_lane_indices())

  out = pl.pallas_call(
      kern,
      out_shape=jax.ShapeDtypeStruct((c, lanes), x.dtype),
      grid=(1,),
      in_specs=[
          pl.BlockSpec((c, lanes), lambda i: (0, 0)),
          full_spec(w1), full_spec(b1), full_spec(w2), full_spec(b2),
          full_spec(wdt), full_spec(bd), full_spec(wu), full_spec(bu),
          full_spec(wf), full_spec(bf),
      ],
      out_specs=pl.BlockSpec((c, lanes), lambda i: (0, 0)),
      scratch_shapes=[pltpu.VMEM((9 * c, lanes), jnp.bfloat16)],
      # Total VMEM use here is ~1 MiB, so the default scoped limit is fine.
      # TODO(synk): at production sizes compute vmem_limit_bytes from the tile
      #             sizes instead of relying on defaults.
      compiler_params=pltpu.CompilerParams(
          dimension_semantics=("arbitrary",)),
  )(x_merged, w1, b1, w2, b2, wdt, bd, wu, bu, wf, bf)

  return jnp.transpose(out.reshape(c, n, hw), (1, 0, 2)).reshape(n, c, h, w)


# ----------------------------- pure-JAX reference -----------------------------

def _conv_ref(x, w, b):                      # x NCHW, w HWIO
  y = lax.conv_general_dilated(x, w, window_strides=(1, 1), padding="SAME",
                               dimension_numbers=("NCHW", "HWIO", "NCHW"))
  return y + b[None, :, None, None]


def _rcab_ref(x, p):
  r = jnp.maximum(_conv_ref(x, p["w_conv1"], p["b_conv1"]), 0.0)
  r = _conv_ref(r, p["w_conv2"], p["b_conv2"])
  pooled = jnp.mean(r, axis=(2, 3))                              # (N, C)
  z = jnp.maximum(pooled @ p["w_down"].T + p["b_down"], 0.0)     # (N, Cr)
  s = jax.nn.sigmoid(z @ p["w_up"].T + p["b_up"])                # (N, C)
  return x + r * s[:, :, None, None]


def _group_ref(x, params):
  h = x
  for p in params["blocks"]:
    h = _rcab_ref(h, p)
  return x + _conv_ref(h, params["w_final"], params["b_final"])


# ----------------------------- param init -----------------------------

def init_params(key, num_blocks=NUM_RESIDUAL_BLOCKS, c=NUM_CHANNELS,
                r=REDUCTION_RATIO):
  cr = c // r
  scale = 0.05
  blocks = []
  for _ in range(num_blocks):
    key, *ks = jax.random.split(key, 9)
    blocks.append({
        "w_conv1": scale * jax.random.normal(ks[0], (KERNEL_SIZE, KERNEL_SIZE, c, c), jnp.float32),
        "b_conv1": scale * jax.random.normal(ks[1], (c,), jnp.float32),
        "w_conv2": scale * jax.random.normal(ks[2], (KERNEL_SIZE, KERNEL_SIZE, c, c), jnp.float32),
        "b_conv2": scale * jax.random.normal(ks[3], (c,), jnp.float32),
        "w_down": scale * jax.random.normal(ks[4], (cr, c), jnp.float32),   # (out, in)
        "b_down": scale * jax.random.normal(ks[5], (cr,), jnp.float32),
        "w_up": scale * jax.random.normal(ks[6], (c, cr), jnp.float32),     # (out, in)
        "b_up": scale * jax.random.normal(ks[7], (c,), jnp.float32),
    })
  key, k1, k2 = jax.random.split(key, 3)
  return {
      "blocks": blocks,
      "w_final": scale * jax.random.normal(k1, (KERNEL_SIZE, KERNEL_SIZE, c, c), jnp.float32),
      "b_final": scale * jax.random.normal(k2, (c,), jnp.float32),
  }


# ----------------------------- main -----------------------------

if __name__ == "__main__":
  key = jax.random.PRNGKey(0)
  key, kx = jax.random.split(key)

  N, H, W = 2, 16, 16                       # N*H*W = 512 -> lane-dense slabs
  x = jax.random.normal(kx, (N, NUM_CHANNELS, H, W), jnp.float32)
  params = init_params(key)

  out = jax.block_until_ready(residual_group_forward(x, params))
  ref = jax.block_until_ready(_group_ref(x, params))

  assert out.shape == ref.shape == (N, NUM_CHANNELS, H, W)
  max_err = float(jnp.max(jnp.abs(out - ref)))
  # Conv matmuls use bf16 MXU operands with f32 accumulation (residual adds and
  # channel attention stay f32), so tolerance vs. the pure-f32 reference is
  # loosened relative to the previous all-f32 kernel.
  assert max_err < 3e-2, max_err
  print("KERNEL_OK")
</pallas_src>

<mosaic_0001>
module attributes {stable_mosaic.version = 11 : i64} {
  func.func @k(%arg0: memref<8x128xf32, #tpu.memory_space<vmem>>, %arg1: memref<8x128xf32, #tpu.memory_space<vmem>>) attributes {dimension_semantics = [], scalar_prefetch = 0 : i64, scratch_operands = 0 : i64, tpu.core_type = #tpu.core_type<tc>} {
    %c0 = arith.constant 0 : index
    %c0_0 = arith.constant 0 : index
    %0 = vector.load %arg0[%c0, %c0_0] : memref<8x128xf32, #tpu.memory_space<vmem>>, vector<8x128xf32>
    %c1_i32 = arith.constant 1 : i32
    %1 = tpu.dynamic_rotate %0 by %c1_i32 dim 1 : vector<8x128xf32>, i32 -> vector<8x128xf32>
    %c0_1 = arith.constant 0 : index
    %c0_2 = arith.constant 0 : index
    %2 = vector.load %arg1[%c0_1, %c0_2] : memref<8x128xf32, #tpu.memory_space<vmem>>, vector<8x128xf32>
    tpu.vector_store %arg1[%c0_1, %c0_2], %1 {strides = array<i32>} : memref<8x128xf32, #tpu.memory_space<vmem>>, vector<8x128xf32>,
    return
  }
}

</mosaic_0001>

<llo_original>
// kernel: tpu_custom_call.1
$region0: #{tpu_custom_call.1}
  #allocation0 [shape = 'u32[]', space=smem, size = 0x4, offset = 0x4, fixed_abs, tag = 'smem constant byte address 0x4 - core index']
  #allocation1 [shape = 'u32[144,128]{1,0:T(1,128)}', space=vmem, size = 0x12000, scoped, tag = 'internal scratch']
  %s0 = inlined_call_operand.hbm [shape: f32[8,128], index: 0, kind: input, shape index: {}]
  %s1 = inlined_call_operand.hbm [shape: f32[8,128], index: 1, kind: output, shape index: {}]
  %s2 = sld [smem:[#allocation0]]
  $region18: #{tpu_custom_call.1} parent=0
    _
  %s4 = ssub.s32 1, %s2
  %s5 = scalar_select 0, %s4, %s2
  $region1: #{tpu_custom_call.1} parent=0
    #allocation2 [shape = 'u8[4096]{0}', space=vmem, size = 0x1000, scoped, tag = 'input window, operand 0, single buffered']
    #allocation3 [shape = 's32[1]{0}', space=sflag, size = 0x4, scoped, tag = 'scoped memory for tpu_custom_call.1']
    #allocation4 [shape = 's32[1]{0}', space=sflag, size = 0x4, scoped, tag = 'scoped memory for tpu_custom_call.1']
    #allocation5 [shape = 'u8[4096]{0}', space=vmem, size = 0x1000, scoped, tag = 'output window, operand 0, single buffered']
    %6 = vsyncpa [#allocation3], 0
    %7 = vsyncpa [#allocation4], 0
    // Predicated region
    $region2: #{tpu_custom_call.1} parent=1 // pred_check
      _
    $region3: #{tpu_custom_call.1} parent=1 // pred_check_branch
      %9 = sbr.rel (0) target = $region5
    $region4: #{tpu_custom_call.1} parent=1 // pred_region
      %s11 = ssub.s32 128, 128
      %12 = vsyncadd [#allocation3], %s11
      %s14 = sshll.u32 [#allocation2], 4
      %s15 = int_to_ptr.vmem [resolvable:$true] %s14
      %17 = dma.hbm_to_vmem [thread:$0]  %s0, 128, %s15, [#allocation3]
    $region5: #{tpu_custom_call.1} parent=1 // pred_fallthru
      _
    // Predicated region
    $region6: #{tpu_custom_call.1} parent=1 // pred_check
      _
    $region7: #{tpu_custom_call.1} parent=1 // pred_check_branch
      %19 = sbr.rel (0) target = $region9
    $region8: #{tpu_custom_call.1} parent=1 // pred_region
      %20 = dma.done [#allocation3], 128
    $region9: #{tpu_custom_call.1} parent=1 // pred_fallthru
      _
    %v21 = vld [vmem:[#allocation2] sm:$0xff]
    %22 = vrot.lane.b32.xlu0 %v21, 1
    %v23 = vpop.permute.xlu0 %22
    %24 = vst [vmem:[#allocation5] sm:$0xff] %v23
    // Predicated region
    $region10: #{tpu_custom_call.1} parent=1 // pred_check
      _
    $region11: #{tpu_custom_call.1} parent=1 // pred_check_branch
      %26 = sbr.rel (0) target = $region13
    $region12: #{tpu_custom_call.1} parent=1 // pred_region
      %s28 = ssub.s32 128, 128
      %29 = vsyncadd [#allocation4], %s28
      %s31 = sshll.u32 [#allocation5], 4
      %s32 = int_to_ptr.vmem [resolvable:$true] %s31
      %34 = dma.vmem_to_hbm [thread:$0]  %s32, 128, %s1, [#allocation4]
    $region13: #{tpu_custom_call.1} parent=1 // pred_fallthru
      _
    // Predicated region
    $region14: #{tpu_custom_call.1} parent=1 // pred_check
      _
    $region15: #{tpu_custom_call.1} parent=1 // pred_check_branch
      %36 = sbr.rel (0) target = $region17
    $region16: #{tpu_custom_call.1} parent=1 // pred_region
      %37 = dma.done [#allocation4], 128
    $region17: #{tpu_custom_call.1} parent=1 // pred_fallthru
      _
    %38 = vsyncpa [#allocation3], 1
    %39 = vsyncpa [#allocation4], 1

</llo_original>
